<compile_context>
chip_gen: v5e
topology: v5e:2x2
jax: 0.10.0
libtpu: 0.0.40
codegen_flags: <defaults>
</compile_context>

<pallas_src>
import functools
from typing import NamedTuple

import jax
import jax.numpy as jnp
from jax.experimental import pallas as pl
from jax.experimental.pallas import tpu as pltpu


def _round_up(n, m):
    return ((n + m - 1) // m) * m


def _cdiv(a, b):
    return -(-a // b)


# ---------------------------------------------------------------------------
# Generation-aware tuning knobs
# ---------------------------------------------------------------------------
@functools.lru_cache(maxsize=1)
def _tpu_config():
    kind = ""
    try:
        kind = jax.devices()[0].device_kind.lower()
    except Exception:
        pass
    vmem = None
    try:
        vmem = int(pltpu.get_tpu_info().vmem_capacity_bytes)
    except Exception:
        vmem = None
    if vmem is None:
        vmem = (64 << 20) if "v7" in kind else (128 << 20)

    small_vmem = vmem <= (64 << 20)  # v7x-class: 64 MiB per TensorCore
    is_v5e = ("v5 lite" in kind) or ("v5e" in kind) or ("v5lite" in kind)

    if small_vmem:
        # v7x: VMEM is the scarce resource; cap tiles and the scoped limit.
        tm_max, tk_max, tm_align, vmem_cap = 512, 512, 256, 56 << 20
    elif is_v5e:
        # v5e: 4x128^2 MXU, ~0.82 TB/s HBM -> tm=512 is comfortably MXU-bound.
        tm_max, tk_max, tm_align, vmem_cap = 512, 1024, 128, 100 << 20
    else:
        # v6e (default): 2x256^2 MXU, crossover ~tm=640 -> go to 1024.
        tm_max, tk_max, tm_align, vmem_cap = 1024, 1024, 256, 100 << 20

    return dict(kind=kind, vmem=vmem, vmem_cap=vmem_cap,
                tm_max=tm_max, tk_max=tk_max, tm_align=tm_align,
                two_cores=("v7" in kind))


def _choose_tk(d_ff_p, tk_max):
    """Largest multiple of 128 that exactly divides d_ff_p and is <= tk_max."""
    g = d_ff_p // 128
    best = 1
    for cand in range(1, min(g, max(tk_max // 128, 1)) + 1):
        if g % cand == 0:
            best = cand
    return best * 128


def _choose_tm(n_tok, cfg):
    """Token tile: minimize padding waste, keep both cores busy on v7x."""
    tm_max, tm_align = cfg["tm_max"], cfg["tm_align"]
    n_tiles = _cdiv(n_tok, tm_max)
    # Two-TensorCore parts: make sure the "parallel" axis has >= 2 tiles.
    if cfg["two_cores"] and n_tiles == 1 and n_tok >= 2 * tm_align:
        n_tiles = 2
    tm = _round_up(_cdiv(n_tok, n_tiles), 8)
    # Bump to an MXU-friendly multiple only when the extra padding is <~12.5%.
    tm_a = min(_round_up(tm, tm_align), tm_max)
    if tm_a >= tm and (tm_a * n_tiles - n_tok) <= max(8, n_tok // 8):
        tm = tm_a
    return tm


def _vmem_estimate(tm, tk, d_model_p, xb, wb, ob):
    """Rough per-call VMEM footprint (double-buffered blocks + scratch)."""
    return (2 * tm * d_model_p * xb          # x tile
            + 2 * d_model_p * tk * wb        # w1 column tile
            + 2 * tk * d_model_p * wb        # w2 row tile
            + 2 * tm * d_model_p * ob        # out tile
            + tm * d_model_p * 4             # f32 accumulator scratch
            + 4 * (tk + d_model_p) * 4)      # b1 / b2 tiles (tiny)


# ---------------------------------------------------------------------------
# Weight preparation (hoisted out of the per-call hot path)
# ---------------------------------------------------------------------------
class FFNParams(NamedTuple):
    w1: jax.Array   # [d_model_p, d_ff_p]   (compute dtype)
    b1: jax.Array   # [1, d_ff_p]           (f32)
    w2: jax.Array   # [d_ff_p, d_model_p]   (compute dtype)
    b2: jax.Array   # [1, d_model_p]        (f32)
    d_model: int
    d_ff: int


def prepare_ffn_params(w1, b1, w2, b2, *, compute_dtype=None):
    """Pad (and optionally cast) the FFN weights once.

    compute_dtype=jnp.bfloat16 enables the fast MXU path (accumulation stays
    f32); leave None to keep the weights' own dtype.
    """
    d_model, d_ff = w1.shape
    d_model_p = _round_up(d_model, 128)
    d_ff_p = _round_up(d_ff, 128)
    wdt = compute_dtype if compute_dtype is not None else w1.dtype

    def pad2(a, r, c):
        return a if a.shape == (r, c) else jnp.pad(
            a, ((0, r - a.shape[0]), (0, c - a.shape[1])))

    w1_p = pad2(w1, d_model_p, d_ff_p).astype(wdt)
    w2_p = pad2(w2, d_ff_p, d_model_p).astype(wdt)
    b1_p = jnp.pad(b1.astype(jnp.float32), (0, d_ff_p - d_ff)).reshape(1, d_ff_p)
    b2_p = jnp.pad(b2.astype(jnp.float32), (0, d_model_p - d_model)).reshape(1, d_model_p)
    return FFNParams(w1_p, b1_p, w2_p, b2_p, int(d_model), int(d_ff))


# ---------------------------------------------------------------------------
# Kernel
# ---------------------------------------------------------------------------
def _ffn_kernel(x_ref, w1_ref, b1_ref, w2_ref, b2_ref, o_ref, acc_ref):
    k = pl.program_id(1)

    @pl.when(k == 0)
    def _init():
        acc_ref[...] = jnp.zeros_like(acc_ref)

    x = x_ref[...]
    if x.dtype != w1_ref.dtype:          # opt-in bf16 compute path
        x = x.astype(w1_ref.dtype)

    # h_k = relu(x @ w1[:, k_tile] + b1[k_tile])   (f32 accumulation on MXU)
    h = jnp.dot(x, w1_ref[...], preferred_element_type=jnp.float32)
    h = jnp.maximum(h + b1_ref[...], 0.0)

    # acc += h_k @ w2[k_tile, :]
    acc_ref[...] += jnp.dot(h.astype(w2_ref.dtype), w2_ref[...],
                            preferred_element_type=jnp.float32)

    @pl.when(k == pl.num_programs(1) - 1)
    def _finalize():
        o_ref[...] = (acc_ref[...] + b2_ref[...]).astype(o_ref.dtype)


# ---------------------------------------------------------------------------
# Wrapper
# ---------------------------------------------------------------------------
def feed_forward(x, params: FFNParams):
    """x: [..., d_model] -> [..., d_model].  Fused Linear->ReLU->Linear."""
    d_model = params.d_model
    assert x.shape[-1] == d_model
    lead = x.shape[:-1]
    n_tok = 1
    for s in lead:
        n_tok *= s

    cfg = _tpu_config()
    d_model_p, d_ff_p = params.w1.shape

    tk = _choose_tk(d_ff_p, cfg["tk_max"])
    tm = _choose_tm(n_tok, cfg)

    xb = x.dtype.itemsize
    wb = params.w1.dtype.itemsize
    ob = xb

    # Shrink tiles until the block footprint fits the generation's VMEM budget.
    budget = max(cfg["vmem_cap"] - (8 << 20), 16 << 20)
    while _vmem_estimate(tm, tk, d_model_p, xb, wb, ob) > budget:
        if tk > 128:
            tk = _choose_tk(d_ff_p, tk - 128)
        elif tm > 8:
            tm = max(_round_up(tm // 2, 8), 8)
        else:
            # TODO(synk): add an N-tiling grid axis over d_model for very large
            # d_model on 64 MiB-VMEM parts (v7x) instead of relying on tm/tk.
            break

    n_tok_p = _round_up(n_tok, tm)

    x2 = x.reshape(n_tok, d_model)
    if (n_tok_p, d_model_p) != (n_tok, d_model):
        x2 = jnp.pad(x2, ((0, n_tok_p - n_tok), (0, d_model_p - d_model)))

    grid = (n_tok_p // tm, d_ff_p // tk)

    est = _vmem_estimate(tm, tk, d_model_p, xb, wb, ob)
    vmem_limit = int(min(cfg["vmem"] - (4 << 20),
                         max(cfg["vmem_cap"], est + (8 << 20))))

    out_p = pl.pallas_call(
        _ffn_kernel,
        out_shape=jax.ShapeDtypeStruct((n_tok_p, d_model_p), x.dtype),
        grid=grid,
        in_specs=[
            pl.BlockSpec((tm, d_model_p), lambda i, k: (i, 0)),   # x tile
            pl.BlockSpec((d_model_p, tk), lambda i, k: (0, k)),   # w1 col-tile
            pl.BlockSpec((1, tk),         lambda i, k: (0, k)),   # b1 tile
            pl.BlockSpec((tk, d_model_p), lambda i, k: (k, 0)),   # w2 row-tile
            pl.BlockSpec((1, d_model_p),  lambda i, k: (0, 0)),   # b2
        ],
        out_specs=pl.BlockSpec((tm, d_model_p), lambda i, k: (i, 0)),
        scratch_shapes=[pltpu.VMEM((tm, d_model_p), jnp.float32)],
        compiler_params=pltpu.CompilerParams(
            dimension_semantics=("parallel", "arbitrary"),
            vmem_limit_bytes=vmem_limit,
        ),
    )(x2, params.w1, params.b1, params.w2, params.b2)

    out = out_p[:n_tok, :d_model]
    return out.reshape(*lead, d_model)


def feed_forward_unprepared(x, w1, b1, w2, b2, *, compute_dtype=None):
    """Convenience wrapper matching the old (per-call padding) signature."""
    return feed_forward(x, prepare_ffn_params(w1, b1, w2, b2,
                                              compute_dtype=compute_dtype))


def _reference(x, w1, b1, w2, b2):
    h = jnp.maximum(x @ w1 + b1, 0.0)
    return h @ w2 + b2


if __name__ == "__main__":
    # Small shapes consistent with the module: batch=2, seq=8, d_model=32, d_ff=64
    batch, seq, d_model, d_ff = 2, 8, 32, 64

    key = jax.random.PRNGKey(0)
    kx, kw1, kb1, kw2, kb2 = jax.random.split(key, 5)

    x = jax.random.normal(kx, (batch, seq, d_model), dtype=jnp.float32)
    # Deterministic init mimicking nn.Linear's uniform(-1/sqrt(fan_in), ...)
    lim1 = 1.0 / (d_model ** 0.5)
    lim2 = 1.0 / (d_ff ** 0.5)
    w1 = jax.random.uniform(kw1, (d_model, d_ff), jnp.float32, -lim1, lim1)
    b1 = jax.random.uniform(kb1, (d_ff,), jnp.float32, -lim1, lim1)
    w2 = jax.random.uniform(kw2, (d_ff, d_model), jnp.float32, -lim2, lim2)
    b2 = jax.random.uniform(kb2, (d_model,), jnp.float32, -lim2, lim2)

    params = prepare_ffn_params(w1, b1, w2, b2)   # weight padding hoisted here
    out = feed_forward(x, params)
    out = jax.block_until_ready(out)

    ref = _reference(x, w1, b1, w2, b2)
    assert out.shape == (batch, seq, d_model)
    assert jnp.allclose(out, ref, atol=1e-5, rtol=1e-5)
    print("KERNEL_OK")
</pallas_src>

<mosaic_0001>
module attributes {stable_mosaic.version = 11 : i64} {
  func.func @_ffn_kernel(%arg0: i32, %arg1: i32, %arg2: memref<16x128xf32, #tpu.memory_space<vmem>>, %arg3: memref<128x128xf32, #tpu.memory_space<vmem>>, %arg4: memref<1x128xf32, #tpu.memory_space<vmem>>, %arg5: memref<128x128xf32, #tpu.memory_space<vmem>>, %arg6: memref<1x128xf32, #tpu.memory_space<vmem>>, %arg7: memref<16x128xf32, #tpu.memory_space<vmem>>, %arg8: memref<16x128xf32, #tpu.memory_space<vmem>>) attributes {dimension_semantics = [#tpu.dimension_semantics<parallel>, #tpu.dimension_semantics<arbitrary>], iteration_bounds = array<i64: 1, 1>, scalar_prefetch = 0 : i64, scratch_operands = 1 : i64, tpu.core_type = #tpu.core_type<tc>, window_params = [{transform_indices = @transform_0, window_bounds = array<i64: 16, 128>}, {transform_indices = @transform_1, window_bounds = array<i64: 128, 128>}, {transform_indices = @transform_2, window_bounds = array<i64: 1, 128>}, {transform_indices = @transform_3, window_bounds = array<i64: 128, 128>}, {pipeline_mode = #tpu.pipeline_mode<synchronous>, transform_indices = @transform_4, window_bounds = array<i64: 1, 128>}, {transform_indices = @transform_5, window_bounds = array<i64: 16, 128>}]} {
    %c0_i32 = arith.constant 0 : i32
    %0 = arith.cmpi eq, %arg1, %c0_i32 : i32
    %1 = arith.extui %0 : i1 to i32
    %c0_i32_0 = arith.constant 0 : i32
    %2 = arith.cmpi ne, %1, %c0_i32_0 : i32
    scf.if %2 {
      %cst_16 = arith.constant 0.000000e+00 : f32
      %19 = vector.broadcast %cst_16 : f32 to vector<16x128xf32>
      %c0_17 = arith.constant 0 : index
      %c0_18 = arith.constant 0 : index
      %20 = vector.load %arg8[%c0_17, %c0_18] : memref<16x128xf32, #tpu.memory_space<vmem>>, vector<16x128xf32>
      tpu.vector_store %arg8[%c0_17, %c0_18], %19 {strides = array<i32>} : memref<16x128xf32, #tpu.memory_space<vmem>>, vector<16x128xf32>,
    } else {
    }
    %c0 = arith.constant 0 : index
    %c0_1 = arith.constant 0 : index
    %3 = vector.load %arg2[%c0, %c0_1] : memref<16x128xf32, #tpu.memory_space<vmem>>, vector<16x128xf32>
    %c0_2 = arith.constant 0 : index
    %c0_3 = arith.constant 0 : index
    %4 = vector.load %arg3[%c0_2, %c0_3] : memref<128x128xf32, #tpu.memory_space<vmem>>, vector<128x128xf32>
    %cst = arith.constant dense<0.000000e+00> : vector<16x128xf32>
    %5 = tpu.matmul %3, %4, %cst {dimension_numbers = #tpu.dot_dimension_numbers<[1], [0], [0], [1], [0, 0, 1, 1], [], []>} : vector<16x128xf32>, vector<128x128xf32>, vector<16x128xf32> -> vector<16x128xf32>
    %c0_4 = arith.constant 0 : index
    %c0_5 = arith.constant 0 : index
    %6 = vector.load %arg4[%c0_4, %c0_5] : memref<1x128xf32, #tpu.memory_space<vmem>>, vector<1x128xf32>
    %7 = vector.broadcast %6 : vector<1x128xf32> to vector<16x128xf32>
    %8 = arith.addf %5, %7 : vector<16x128xf32>
    %cst_6 = arith.constant 0.000000e+00 : f32
    %9 = vector.broadcast %cst_6 : f32 to vector<16x128xf32>
    %10 = arith.maximumf %8, %9 : vector<16x128xf32>
    %c0_7 = arith.constant 0 : index
    %c0_8 = arith.constant 0 : index
    %11 = vector.load %arg8[%c0_7, %c0_8] : memref<16x128xf32, #tpu.memory_space<vmem>>, vector<16x128xf32>
    %c0_9 = arith.constant 0 : index
    %c0_10 = arith.constant 0 : index
    %12 = vector.load %arg5[%c0_9, %c0_10] : memref<128x128xf32, #tpu.memory_space<vmem>>, vector<128x128xf32>
    %cst_11 = arith.constant dense<0.000000e+00> : vector<16x128xf32>
    %13 = tpu.matmul %10, %12, %cst_11 {dimension_numbers = #tpu.dot_dimension_numbers<[1], [0], [0], [1], [0, 0, 1, 1], [], []>} : vector<16x128xf32>, vector<128x128xf32>, vector<16x128xf32> -> vector<16x128xf32>
    %14 = arith.addf %11, %13 : vector<16x128xf32>
    %c0_12 = arith.constant 0 : index
    %c0_13 = arith.constant 0 : index
    %15 = vector.load %arg8[%c0_12, %c0_13] : memref<16x128xf32, #tpu.memory_space<vmem>>, vector<16x128xf32>
    tpu.vector_store %arg8[%c0_12, %c0_13], %14 {strides = array<i32>} : memref<16x128xf32, #tpu.memory_space<vmem>>, vector<16x128xf32>,
    %c0_i32_14 = arith.constant 0 : i32
    %16 = arith.cmpi eq, %arg1, %c0_i32_14 : i32
    %17 = arith.extui %16 : i1 to i32
    %c0_i32_15 = arith.constant 0 : i32
    %18 = arith.cmpi ne, %17, %c0_i32_15 : i32
    scf.if %18 {
      %c0_16 = arith.constant 0 : index
      %c0_17 = arith.constant 0 : index
      %19 = vector.load %arg8[%c0_16, %c0_17] : memref<16x128xf32, #tpu.memory_space<vmem>>, vector<16x128xf32>
      %c0_18 = arith.constant 0 : index
      %c0_19 = arith.constant 0 : index
      %20 = vector.load %arg6[%c0_18, %c0_19] : memref<1x128xf32, #tpu.memory_space<vmem>>, vector<1x128xf32>
      %21 = vector.broadcast %20 : vector<1x128xf32> to vector<16x128xf32>
      %22 = arith.addf %19, %21 : vector<16x128xf32>
      %c0_20 = arith.constant 0 : index
      %c0_21 = arith.constant 0 : index
      %23 = vector.load %arg7[%c0_20, %c0_21] : memref<16x128xf32, #tpu.memory_space<vmem>>, vector<16x128xf32>
      tpu.vector_store %arg7[%c0_20, %c0_21], %22 {strides = array<i32>} : memref<16x128xf32, #tpu.memory_space<vmem>>, vector<16x128xf32>,
    } else {
    }
    return
  }
  func.func @transform_0(%arg0: i32, %arg1: i32) -> (i32, i32) {
    %c0_i32 = arith.constant 0 : i32
    %c0_i32_0 = arith.constant 0 : i32
    return %arg0, %c0_i32 : i32, i32
  }
  func.func @transform_1(%arg0: i32, %arg1: i32) -> (i32, i32) {
    %c0_i32 = arith.constant 0 : i32
    %c0_i32_0 = arith.constant 0 : i32
    return %c0_i32, %arg1 : i32, i32
  }
  func.func @transform_2(%arg0: i32, %arg1: i32) -> (i32, i32) {
    %c0_i32 = arith.constant 0 : i32
    %c0_i32_0 = arith.constant 0 : i32
    return %c0_i32, %arg1 : i32, i32
  }
  func.func @transform_3(%arg0: i32, %arg1: i32) -> (i32, i32) {
    %c0_i32 = arith.constant 0 : i32
    %c0_i32_0 = arith.constant 0 : i32
    return %arg1, %c0_i32 : i32, i32
  }
  func.func @transform_4(%arg0: i32, %arg1: i32) -> (i32, i32) {
    %c0_i32 = arith.constant 0 : i32
    %c0_i32_0 = arith.constant 0 : i32
    %c0_i32_1 = arith.constant 0 : i32
    return %c0_i32, %c0_i32_0 : i32, i32
  }
  func.func @transform_5(%arg0: i32, %arg1: i32) -> (i32, i32) {
    %c0_i32 = arith.constant 0 : i32
    %c0_i32_0 = arith.constant 0 : i32
    return %arg0, %c0_i32 : i32, i32
  }
}

</mosaic_0001>

<llo_original>
// kernel: tpu_custom_call.1
$region0: #{tpu_custom_call.1}
  #allocation0 [shape = 'u32[]', space=smem, size = 0x4, offset = 0x4, fixed_abs, tag = 'smem constant byte address 0x4 - core index']
  #allocation1 [shape = 'u32[72,128]{1,0:T(1,128)}', space=vmem, size = 0x9000, scoped, tag = 'internal scratch']
  #allocation2 [shape = 'f32[16,128]{1,0:T(8,128)}', space=vmem, size = 0x2000, scoped, tag = 'scratch operand']
  %s0 = inlined_call_operand.hbm [shape: f32[16,128], index: 0, kind: input, shape index: {}]
  %s1 = inlined_call_operand.hbm [shape: f32[128,128], index: 1, kind: input, shape index: {}]
  %s2 = inlined_call_operand.vmem [shape: f32[1,128], index: 2, kind: input, shape index: {}]
  %s3 = inlined_call_operand.hbm [shape: f32[128,128], index: 3, kind: input, shape index: {}]
  %s4 = inlined_call_operand.vmem [shape: f32[1,128], index: 4, kind: input, shape index: {}]
  %s5 = inlined_call_operand.hbm [shape: f32[16,128], index: 5, kind: output, shape index: {}]
  %s6 = sld [smem:[#allocation0]]
  $region50: #{tpu_custom_call.1} parent=0
    _
  %s8 = ssub.s32 1, %s6
  %s9 = scalar_select 0, %s8, %s6
  $region1: #{tpu_custom_call.1} parent=0
    #allocation3 [shape = 'u8[8192]{0}', space=vmem, size = 0x2000, scoped, tag = 'input window, operand 0, single buffered']
    #allocation4 [shape = 's32[1]{0}', space=sflag, size = 0x4, scoped, tag = 'scoped memory for tpu_custom_call.1']
    #allocation5 [shape = 's32[1]{0}', space=sflag, size = 0x4, scoped, tag = 'scoped memory for tpu_custom_call.1']
    #allocation6 [shape = 'u8[65536]{0}', space=vmem, size = 0x10000, scoped, tag = 'input window, operand 1, single buffered']
    #allocation7 [shape = 's32[1]{0}', space=sflag, size = 0x4, scoped, tag = 'scoped memory for tpu_custom_call.1']
    #allocation8 [shape = 'u8[65536]{0}', space=vmem, size = 0x10000, scoped, tag = 'input window, operand 3, single buffered']
    #allocation9 [shape = 'u8[8192]{0}', space=vmem, size = 0x2000, scoped, tag = 'output window, operand 0, single buffered']
    %10 = vsyncpa [#allocation4], 0
    %11 = vsyncpa [#allocation7], 0
    %12 = vsyncpa [#allocation5], 0
    // Predicated region
    $region2: #{tpu_custom_call.1} parent=1 // pred_check
      _
    $region3: #{tpu_custom_call.1} parent=1 // pred_check_branch
      %14 = sbr.rel (0) target = $region5
    $region4: #{tpu_custom_call.1} parent=1 // pred_region
      %16 = vsyncadd [#allocation4], 0
      %s17 = sshll.u32 %s0, 4
      %s18 = int_to_ptr.hbm [resolvable:$true] %s17
      %s19 = sshll.u32 [#allocation3], 4
      %s20 = int_to_ptr.vmem [resolvable:$true] %s19
      %25 = dma.hbm_to_vmem [thread:$0]  %s18, 256, %s20, [#allocation4], 128, 128, 8
    $region5: #{tpu_custom_call.1} parent=1 // pred_fallthru
      _
    // Predicated region
    $region6: #{tpu_custom_call.1} parent=1 // pred_check
      _
    $region7: #{tpu_custom_call.1} parent=1 // pred_check_branch
      %27 = sbr.rel (0) target = $region9
    $region8: #{tpu_custom_call.1} parent=1 // pred_region
      %29 = vsyncadd [#allocation7], 0
      %s30 = sshll.u32 %s1, 4
      %s31 = int_to_ptr.hbm [resolvable:$true] %s30
      %s32 = sshll.u32 [#allocation6], 4
      %s33 = int_to_ptr.vmem [resolvable:$true] %s32
      %38 = dma.hbm_to_vmem [thread:$0]  %s31, 2048, %s33, [#allocation7], 128, 128, 8
    $region9: #{tpu_custom_call.1} parent=1 // pred_fallthru
      _
    // Predicated region
    $region10: #{tpu_custom_call.1} parent=1 // pred_check
      _
    $region11: #{tpu_custom_call.1} parent=1 // pred_check_branch
      %40 = sbr.rel (0) target = $region13
    $region12: #{tpu_custom_call.1} parent=1 // pred_region
      _
    $region13: #{tpu_custom_call.1} parent=1 // pred_fallthru
      _
    // Predicated region
    $region14: #{tpu_custom_call.1} parent=1 // pred_check
      _
    $region15: #{tpu_custom_call.1} parent=1 // pred_check_branch
      %42 = sbr.rel (0) target = $region17
    $region16: #{tpu_custom_call.1} parent=1 // pred_region
      %44 = vsyncadd [#allocation7], 0
      %s45 = sshll.u32 %s3, 4
      %s46 = int_to_ptr.hbm [resolvable:$true] %s45
      %s47 = sshll.u32 [#allocation8], 4
      %s48 = int_to_ptr.vmem [resolvable:$true] %s47
      %53 = dma.hbm_to_vmem [thread:$0]  %s46, 2048, %s48, [#allocation7], 128, 128, 8
    $region17: #{tpu_custom_call.1} parent=1 // pred_fallthru
      _
    // Predicated region
    $region18: #{tpu_custom_call.1} parent=1 // pred_check
      _
    $region19: #{tpu_custom_call.1} parent=1 // pred_check_branch
      %55 = sbr.rel (0) target = $region21
    $region20: #{tpu_custom_call.1} parent=1 // pred_region
      _
    $region21: #{tpu_custom_call.1} parent=1 // pred_fallthru
      _
    // Predicated region
    $region22: #{tpu_custom_call.1} parent=1 // pred_check
      _
    $region23: #{tpu_custom_call.1} parent=1 // pred_check_branch
      %57 = sbr.rel (0) target = $region25
    $region24: #{tpu_custom_call.1} parent=1 // pred_region
      %59 = dma.done [#allocation4], 256
    $region25: #{tpu_custom_call.1} parent=1 // pred_fallthru
      _
    // Predicated region
    $region26: #{tpu_custom_call.1} parent=1 // pred_check
      _
    $region27: #{tpu_custom_call.1} parent=1 // pred_check_branch
      %61 = sbr.rel (0) target = $region29
    $region28: #{tpu_custom_call.1} parent=1 // pred_region
      %63 = dma.done [#allocation7], 2048
    $region29: #{tpu_custom_call.1} parent=1 // pred_fallthru
      _
    // Predicated region
    $region30: #{tpu_custom_call.1} parent=1 // pred_check
      _
    $region31: #{tpu_custom_call.1} parent=1 // pred_check_branch
      %65 = sbr.rel (0) target = $region33
    $region32: #{tpu_custom_call.1} parent=1 // pred_region
      %67 = dma.done [#allocation7], 2048
    $region33: #{tpu_custom_call.1} parent=1 // pred_fallthru
      _
    %p68 = scmp.eq.s32.totalorder 0, 0
    // Predicated region
    $region34: #{tpu_custom_call.1} parent=1 // pred_check
      %p69 = pneg %p68
    $region35: #{tpu_custom_call.1} parent=1 // pred_check_branch
      %71 = sbr.rel (%p69) target = $region37
    $region36: #{tpu_custom_call.1} parent=1 // pred_region
      %72 = vst [vmem:[#allocation2] sm:$0xff] 0.0
      %73 = vst [vmem:[#allocation2 + $0x8] sm:$0xff] 0.0
    $region37: #{tpu_custom_call.1} parent=1 // pred_fallthru
      _
    %v74 = vld [vmem:[#allocation3] sm:$0xff]
    %v75 = vld [vmem:[#allocation3 + $0x8] sm:$0xff]
    %v76 = vld [vmem:[#allocation6] sm:$0xff]
    %v77 = vld [vmem:[#allocation6 + $0x8] sm:$0xff]
    %v78 = vld [vmem:[#allocation6 + $0x10] sm:$0xff]
    %v79 = vld [vmem:[#allocation6 + $0x18] sm:$0xff]
    %v80 = vld [vmem:[#allocation6 + $0x20] sm:$0xff]
    %v81 = vld [vmem:[#allocation6 + $0x28] sm:$0xff]
    %v82 = vld [vmem:[#allocation6 + $0x30] sm:$0xff]
    %v83 = vld [vmem:[#allocation6 + $0x38] sm:$0xff]
    %v84 = vld [vmem:[#allocation6 + $0x40] sm:$0xff]
    %v85 = vld [vmem:[#allocation6 + $0x48] sm:$0xff]
    %v86 = vld [vmem:[#allocation6 + $0x50] sm:$0xff]
    %v87 = vld [vmem:[#allocation6 + $0x58] sm:$0xff]
    %v88 = vld [vmem:[#allocation6 + $0x60] sm:$0xff]
    %v89 = vld [vmem:[#allocation6 + $0x68] sm:$0xff]
    %v90 = vld [vmem:[#allocation6 + $0x70] sm:$0xff]
    %v91 = vld [vmem:[#allocation6 + $0x78] sm:$0xff]
    %v92 = vld [vmem:[%s2] sm:$0x1]
    %v94 = vperm.slane %v92, 0
    %96 = vmatpush.msra.mxu0 %v91
    %97 = vmatpush.msra.mxu0 %v90
    %98 = vmatpush.msra.mxu0 %v89
    %99 = vmatpush.msra.mxu0 %v88
    %100 = vmatpush.msra.mxu0 %v87
    %101 = vmatpush.msra.mxu0 %v86
    %102 = vmatpush.msra.mxu0 %v85
    %103 = vmatpush.msra.mxu0 %v84
    %104 = vmatpush.msra.mxu0 %v83
    %105 = vmatpush.msra.mxu0 %v82
    %106 = vmatpush.msra.mxu0 %v81
    %107 = vmatpush.msra.mxu0 %v80
    %108 = vmatpush.msra.mxu0 %v79
    %109 = vmatpush.msra.mxu0 %v78
    %110 = vmatpush.msra.mxu0 %v77
    %111 = vmatpush.msra.mxu0 %v76
    %112 = vmatmul.f32.gmra.mxu0 %v74
    %v113 = vpop.f32.mrf.mxu0
    %v114 = vadd.f32 %v94, %v113
    %115 = vmatmul.f32.gmra.mxu0 %v75
    %v116 = vpop.f32.mrf.mxu0
    %v117 = vadd.f32 %v94, %v116
    %118 = vdwg.mxu0
    %v119 = vmax.f32 %v114, 0.0
    %v120 = vmax.f32 %v117, 0.0
    %v121 = vld [vmem:[#allocation2] sm:$0xff]
    %v122 = vld [vmem:[#allocation2 + $0x8] sm:$0xff]
    %v123 = vld [vmem:[#allocation8] sm:$0xff]
    %v124 = vld [vmem:[#allocation8 + $0x8] sm:$0xff]
    %v125 = vld [vmem:[#allocation8 + $0x10] sm:$0xff]
    %v126 = vld [vmem:[#allocation8 + $0x18] sm:$0xff]
    %v127 = vld [vmem:[#allocation8 + $0x20] sm:$0xff]
    %v128 = vld [vmem:[#allocation8 + $0x28] sm:$0xff]
    %v129 = vld [vmem:[#allocation8 + $0x30] sm:$0xff]
    %v130 = vld [vmem:[#allocation8 + $0x38] sm:$0xff]
    %v131 = vld [vmem:[#allocation8 + $0x40] sm:$0xff]
    %v132 = vld [vmem:[#allocation8 + $0x48] sm:$0xff]
    %v133 = vld [vmem:[#allocation8 + $0x50] sm:$0xff]
    %v134 = vld [vmem:[#allocation8 + $0x58] sm:$0xff]
    %v135 = vld [vmem:[#allocation8 + $0x60] sm:$0xff]
    %v136 = vld [vmem:[#allocation8 + $0x68] sm:$0xff]
    %v137 = vld [vmem:[#allocation8 + $0x70] sm:$0xff]
    %v138 = vld [vmem:[#allocation8 + $0x78] sm:$0xff]
    %139 = vmatpush.msra.mxu0 %v138
    %140 = vmatpush.msra.mxu0 %v137
    %141 = vmatpush.msra.mxu0 %v136
    %142 = vmatpush.msra.mxu0 %v135
    %143 = vmatpush.msra.mxu0 %v134
    %144 = vmatpush.msra.mxu0 %v133
    %145 = vmatpush.msra.mxu0 %v132
    %146 = vmatpush.msra.mxu0 %v131
    %147 = vmatpush.msra.mxu0 %v130
    %148 = vmatpush.msra.mxu0 %v129
    %149 = vmatpush.msra.mxu0 %v128
    %150 = vmatpush.msra.mxu0 %v127
    %151 = vmatpush.msra.mxu0 %v126
    %152 = vmatpush.msra.mxu0 %v125
    %153 = vmatpush.msra.mxu0 %v124
    %154 = vmatpush.msra.mxu0 %v123
    %155 = vmatmul.f32.gmra.mxu0 %v119
    %v156 = vpop.f32.mrf.mxu0
    %v157 = vadd.f32 0.0, %v156
    %158 = vmatmul.f32.gmra.mxu0 %v120
    %v159 = vpop.f32.mrf.mxu0
    %v160 = vadd.f32 0.0, %v159
    %161 = vdwg.mxu0
    %v162 = vadd.f32 %v121, %v157
    %v163 = vadd.f32 %v122, %v160
    %164 = vst [vmem:[#allocation2] sm:$0xff] %v162
    %165 = vst [vmem:[#allocation2 + $0x8] sm:$0xff] %v163
    // Predicated region
    $region38: #{tpu_custom_call.1} parent=1 // pred_check
      %p166 = pneg %p68
    $region39: #{tpu_custom_call.1} parent=1 // pred_check_branch
      %168 = sbr.rel (%p166) target = $region41
    $region40: #{tpu_custom_call.1} parent=1 // pred_region
      %v169 = vld [vmem:[#allocation2] sm:$0xff]
      %v170 = vld [vmem:[#allocation2 + $0x8] sm:$0xff]
      %v171 = vld [vmem:[%s4] sm:$0x1]
      %v173 = vperm.slane %v171, 0
      %v175 = vadd.f32 %v169, %v173
      %v176 = vadd.f32 %v170, %v173
      %177 = vst [vmem:[#allocation9] sm:$0xff] %v175
      %178 = vst [vmem:[#allocation9 + $0x8] sm:$0xff] %v176
    $region41: #{tpu_custom_call.1} parent=1 // pred_fallthru
      _
    // Predicated region
    $region42: #{tpu_custom_call.1} parent=1 // pred_check
      _
    $region43: #{tpu_custom_call.1} parent=1 // pred_check_branch
      %180 = sbr.rel (0) target = $region45
    $region44: #{tpu_custom_call.1} parent=1 // pred_region
      %182 = vsyncadd [#allocation5], 0
      %s183 = sshll.u32 [#allocation9], 4
      %s184 = int_to_ptr.vmem [resolvable:$true] %s183
      %s185 = sshll.u32 %s5, 4
      %s186 = int_to_ptr.hbm [resolvable:$true] %s185
      %191 = dma.vmem_to_hbm [thread:$0]  %s184, 256, %s186, [#allocation5], 128, 128, 8
    $region45: #{tpu_custom_call.1} parent=1 // pred_fallthru
      _
    // Predicated region
    $region46: #{tpu_custom_call.1} parent=1 // pred_check
      _
    $region47: #{tpu_custom_call.1} parent=1 // pred_check_branch
      %193 = sbr.rel (0) target = $region49
    $region48: #{tpu_custom_call.1} parent=1 // pred_region
      %195 = dma.done [#allocation5], 256
    $region49: #{tpu_custom_call.1} parent=1 // pred_fallthru
      _
    %196 = vsyncpa [#allocation4], 1
    %197 = vsyncpa [#allocation7], 1
    %198 = vsyncpa [#allocation5], 1

</llo_original>
